<compile_context>
chip_gen: v6e
topology: v6e:2x2x1
jax: 0.10.0
libtpu: 0.0.40
codegen_flags: <defaults>
</compile_context>

<pallas_src>
from functools import partial

import numpy as np

import jax
import jax.numpy as jnp
from jax.experimental import pallas as pl
from jax.experimental.pallas import tpu as pltpu


def _round_up(v, m):
    return ((v + m - 1) // m) * m


def _vmem_usable_bytes():
    try:
        cap = int(pltpu.get_tpu_info().vmem_capacity_bytes)
    except Exception:
        cap = 64 * 2 ** 20          # conservative (v7x-sized) fallback
    return max(int(0.75 * cap), 16 * 2 ** 20)


def _pick_row_block(Ho, Wp, Cp, K, OCp, OCs, KH, use_im2col, vmem_usable):
    """Largest row block that keeps all VMEM buffers within ~half the budget."""
    fixed = (2 * OCp * K * 2            # weights (double-buffered, bf16)
             + 2 * OCp * 4              # bias
             + 2 * Cp * KH * Wp * 2)    # halo rows of the two input buffers
    per_row = (2 * Cp * Wp * 2          # input block (2 bufs, bf16)
               + 2 * OCs * Wp * 4       # output block (2 bufs, f32)
               + OCp * Wp * 4)          # f32 accumulator
    if use_im2col:
        per_row += K * Wp * 2           # bf16 im2col patch scratch
    rb_budget = max(1, (vmem_usable // 2 - fixed) // per_row)
    rb_lanes = max(1, 8192 // max(Wp, 1))      # keep L (matmul N dim) sane
    return int(max(1, min(Ho, rb_budget, rb_lanes)))


# --------------------------------------------------------------------------
# Kernels.  One grid step == one (image, row-block) pair.
#   x_ref     : (Cp, (row_block+KH)*Wp)  bf16   halo'd, row-major flattened window
#   w_ref     : (OCp, K) bf16            [im2col]  or  (KH*KW, OCp, Cp) bf16 [direct]
#   b_ref     : (OCp, 1) f32
#   o_ref     : (OCs, row_block*Wp) f32  lane-dense slab (junk cols stripped later)
#   patch_ref : (K, row_block*Wp) bf16   [im2col only]
# --------------------------------------------------------------------------
def _conv_relu_im2col_kernel(x_ref, w_ref, b_ref, o_ref, patch_ref, *,
                             Wp, KH, KW, Cp, OCs, L):
    # Each (kh, kw) tap is ONE contiguous static lane slice of the flattened
    # window; sublane offsets are bf16-tile aligned because Cp % 16 == 0.
    for kh in range(KH):
        for kw in range(KW):
            tap = kh * KW + kw
            start = kh * Wp + kw
            patch_ref[tap * Cp:(tap + 1) * Cp, :] = x_ref[:, start:start + L]

    acc = jnp.dot(w_ref[...], patch_ref[...],
                  preferred_element_type=jnp.float32)          # (OCp, L) f32
    acc = jnp.maximum(acc + b_ref[...], 0.0)                   # bias + ReLU
    o_ref[...] = acc[:OCs, :].astype(o_ref.dtype)              # single slab store


def _conv_relu_direct_kernel(x_ref, w_ref, b_ref, o_ref, *,
                             Wp, KH, KW, OCs, L):
    acc = None
    for kh in range(KH):
        for kw in range(KW):
            tap = kh * KW + kw
            start = kh * Wp + kw
            part = jnp.dot(w_ref[tap], x_ref[:, start:start + L],
                           preferred_element_type=jnp.float32)  # (OCp, L) f32
            acc = part if acc is None else acc + part
    acc = jnp.maximum(acc + b_ref[...], 0.0)
    o_ref[...] = acc[:OCs, :].astype(o_ref.dtype)


# --------------------------------------------------------------------------
# Wrapper
# --------------------------------------------------------------------------
def basic_conv2d(x_nchw, weight_oihw, bias, *, padding=0, row_block=None):
    """BasicConv2d.forward: Conv2d(stride=1, dilation=1, groups=1) + ReLU.

    x_nchw      : (N, C, H, W)     float32
    weight_oihw : (OC, C, KH, KW)  float32
    bias        : (OC,)            float32
    Returns     : (N, OC, Ho, Wo)  float32 (NCHW)
    """
    N, C, H, W = map(int, x_nchw.shape)
    OC, Cw, KH, KW = map(int, weight_oihw.shape)
    if Cw != C:
        raise ValueError("grouped convolutions are not supported")
    Hp, Wp = H + 2 * padding, W + 2 * padding
    Ho, Wo = Hp - KH + 1, Wp - KW + 1
    if Ho <= 0 or Wo <= 0:
        raise ValueError("kernel larger than padded input")

    Cp = _round_up(C, 16)                  # bf16 sublane tile
    K = KH * KW * Cp
    use_im2col = Cp < 128                  # wide-K fuse only for narrow stems

    OCs = _round_up(OC, 8)                 # channels actually stored (f32 tile)
    OCp = max(OCs, 128)                    # fill the MXU M dimension

    vmem_usable = _vmem_usable_bytes()
    if row_block is None:
        row_block = _pick_row_block(Ho, Wp, Cp, K, OCp, OCs, KH,
                                    use_im2col, vmem_usable)
    rb = int(max(1, min(row_block, Ho)))
    R = -(-Ho // rb)                       # number of row blocks
    Hop = R * rb
    rb_ext = rb + KH                       # halo'd rows per block
    L = rb * Wp                            # flattened lanes per block

    # ---- wrapper-side layout plumbing (bf16, halo-duplicated row blocks) ---
    bottom = (Hop + KH) - padding - H      # zero rows so every tap slice is in bounds
    x_pad = jnp.pad(x_nchw.astype(jnp.bfloat16),
                    ((0, 0), (0, Cp - C), (padding, bottom), (padding, padding)))
    starts = np.arange(R, dtype=np.int32) * rb
    idx = starts[:, None] + np.arange(rb_ext, dtype=np.int32)[None, :]   # (R, rb_ext)
    x_blk = x_pad[:, :, idx, :]                                  # (N, Cp, R, rb_ext, Wp)
    x_blk = jnp.transpose(x_blk, (0, 2, 1, 3, 4)).reshape(N, R, Cp, rb_ext * Wp)

    w_pad = jnp.pad(weight_oihw,
                    ((0, OCp - OC), (0, Cp - C), (0, 0), (0, 0)))   # (OCp, Cp, KH, KW)
    if use_im2col:
        w_arg = jnp.transpose(w_pad, (0, 2, 3, 1)).reshape(OCp, K).astype(jnp.bfloat16)
        w_spec = pl.BlockSpec((OCp, K), lambda n, r: (0, 0))
        scratch = [pltpu.VMEM((K, L), jnp.bfloat16)]
        kern = partial(_conv_relu_im2col_kernel,
                       Wp=Wp, KH=KH, KW=KW, Cp=Cp, OCs=OCs, L=L)
    else:
        w_arg = (jnp.transpose(w_pad, (2, 3, 0, 1))
                 .reshape(KH * KW, OCp, Cp).astype(jnp.bfloat16))
        w_spec = pl.BlockSpec((KH * KW, OCp, Cp), lambda n, r: (0, 0, 0))
        scratch = []
        kern = partial(_conv_relu_direct_kernel,
                       Wp=Wp, KH=KH, KW=KW, OCs=OCs, L=L)
    b_col = jnp.pad(bias, (0, OCp - OC)).reshape(OCp, 1).astype(jnp.float32)

    # ---- generation-aware VMEM limit ---------------------------------------
    est = (2 * Cp * rb_ext * Wp * 2        # input block, double-buffered (bf16)
           + 2 * OCs * L * 4               # output block, double-buffered (f32)
           + 2 * OCp * K * 2 + 2 * OCp * 4  # weights + bias
           + OCp * L * 4                   # f32 accumulator
           + (K * L * 2 if use_im2col else 0))
    vmem_limit = int(min(vmem_usable, max(32 * 2 ** 20, int(1.25 * est))))

    out = pl.pallas_call(
        kern,
        out_shape=jax.ShapeDtypeStruct((N, R, OCs, L), jnp.float32),
        grid=(N, R),
        in_specs=[
            pl.BlockSpec((None, None, Cp, rb_ext * Wp), lambda n, r: (n, r, 0, 0)),
            w_spec,
            pl.BlockSpec((OCp, 1), lambda n, r: (0, 0)),
        ],
        out_specs=pl.BlockSpec((None, None, OCs, L), lambda n, r: (n, r, 0, 0)),
        scratch_shapes=scratch,
        compiler_params=pltpu.CompilerParams(
            dimension_semantics=("parallel", "parallel"),
            vmem_limit_bytes=vmem_limit),
    )(x_blk, w_arg, b_col)

    # Strip junk columns / padded rows / padded channels (layout plumbing only).
    out = out.reshape(N, R, OCs, rb, Wp)
    out = jnp.transpose(out, (0, 2, 1, 3, 4)).reshape(N, OCs, Hop, Wp)
    return out[:, :OC, :Ho, :Wo].astype(x_nchw.dtype)


def _reference(x_nchw, weight_oihw, bias, *, padding=0):
    """Plain-JAX reference: nn.Conv2d (stride 1) + ReLU, NCHW, f32."""
    out = jax.lax.conv_general_dilated(
        x_nchw, weight_oihw,
        window_strides=(1, 1),
        padding=[(padding, padding), (padding, padding)],
        dimension_numbers=("NCHW", "OIHW", "NCHW"),
        precision=jax.lax.Precision.HIGHEST,
    )
    return jnp.maximum(out + bias.reshape(1, -1, 1, 1), 0.0)


if __name__ == "__main__":
    key = jax.random.PRNGKey(0)
    kx, kw_key, kb_key, kx2, kw2_key, kb2_key = jax.random.split(key, 6)

    # ---- small stem-like layer (im2col path): BasicConv2d(4, 8, k=3, pad=1) ---
    N, C, H, W = 2, 4, 16, 16
    OC, KH, KW = 8, 3, 3
    padding = 1
    x = jax.random.normal(kx, (N, C, H, W), dtype=jnp.float32)
    weight = jax.random.normal(kw_key, (OC, C, KH, KW), dtype=jnp.float32) * 0.1
    bias = jax.random.normal(kb_key, (OC,), dtype=jnp.float32) * 0.1

    out = jax.block_until_ready(basic_conv2d(x, weight, bias, padding=padding))
    out_tiled = jax.block_until_ready(
        basic_conv2d(x, weight, bias, padding=padding, row_block=5))
    assert out.shape == (N, OC, H, W), out.shape

    ref_f32 = _reference(x, weight, bias, padding=padding)
    ref_bf16 = _reference(x.astype(jnp.bfloat16).astype(jnp.float32),
                          weight.astype(jnp.bfloat16).astype(jnp.float32),
                          bias, padding=padding)
    assert jnp.allclose(out, ref_bf16, atol=2e-3, rtol=2e-3), \
        "mismatch vs bf16-input reference"
    assert jnp.allclose(out, ref_f32, atol=5e-2, rtol=5e-2), \
        "mismatch vs f32 reference"
    assert jnp.allclose(out, out_tiled, atol=1e-5, rtol=1e-5), \
        "row-block tiling changed results"

    # ---- wide-channel layer (direct per-tap path, Cp >= 128) ------------------
    N2, C2, H2, W2, OC2 = 1, 128, 8, 8, 16
    x2 = jax.random.normal(kx2, (N2, C2, H2, W2), dtype=jnp.float32)
    w2 = jax.random.normal(kw2_key, (OC2, C2, 3, 3), dtype=jnp.float32) * 0.05
    b2 = jax.random.normal(kb2_key, (OC2,), dtype=jnp.float32) * 0.1
    out2 = jax.block_until_ready(basic_conv2d(x2, w2, b2, padding=1))
    ref2 = _reference(x2.astype(jnp.bfloat16).astype(jnp.float32),
                      w2.astype(jnp.bfloat16).astype(jnp.float32), b2, padding=1)
    assert out2.shape == (N2, OC2, H2, W2), out2.shape
    assert jnp.allclose(out2, ref2, atol=5e-3, rtol=5e-3), \
        "mismatch vs bf16-input reference (direct path)"

    print("KERNEL_OK")
</pallas_src>

<mosaic_0001>
module attributes {stable_mosaic.version = 11 : i64} {
  func.func @_conv_relu_im2col_kernel(%arg0: i32, %arg1: i32, %arg2: memref<1x1x16x342xbf16, #tpu.memory_space<vmem>>, %arg3: memref<128x144xbf16, #tpu.memory_space<vmem>>, %arg4: memref<128x1xf32, #tpu.memory_space<vmem>>, %arg5: memref<1x1x8x288xf32, #tpu.memory_space<vmem>>, %arg6: memref<144x288xbf16, #tpu.memory_space<vmem>>) attributes {dimension_semantics = [#tpu.dimension_semantics<parallel>, #tpu.dimension_semantics<parallel>], iteration_bounds = array<i64: 2, 1>, scalar_prefetch = 0 : i64, scratch_operands = 1 : i64, tpu.core_type = #tpu.core_type<tc>, window_params = [{transform_indices = @transform_0, window_bounds = array<i64: 1, 1, 16, 342>}, {pipeline_mode = #tpu.pipeline_mode<synchronous>, transform_indices = @transform_1, window_bounds = array<i64: 128, 144>}, {pipeline_mode = #tpu.pipeline_mode<synchronous>, transform_indices = @transform_2, window_bounds = array<i64: 128, 1>}, {transform_indices = @transform_3, window_bounds = array<i64: 1, 1, 8, 288>}]} {
    %c0 = arith.constant 0 : index
    %c0_0 = arith.constant 0 : index
    %c0_1 = arith.constant 0 : index
    %c0_2 = arith.constant 0 : index
    %0 = vector.load %arg2[%c0, %c0_0, %c0_1, %c0_2] : memref<1x1x16x342xbf16, #tpu.memory_space<vmem>>, vector<1x1x16x288xbf16>
    %1 = vector.shape_cast %0 : vector<1x1x16x288xbf16> to vector<16x288xbf16>
    %c0_3 = arith.constant 0 : index
    %c0_4 = arith.constant 0 : index
    %2 = vector.load %arg6[%c0_3, %c0_4] : memref<144x288xbf16, #tpu.memory_space<vmem>>, vector<16x288xbf16>
    tpu.vector_store %arg6[%c0_3, %c0_4], %1 {strides = array<i32>} : memref<144x288xbf16, #tpu.memory_space<vmem>>, vector<16x288xbf16>,
    %c0_5 = arith.constant 0 : index
    %c0_6 = arith.constant 0 : index
    %c0_7 = arith.constant 0 : index
    %c1 = arith.constant 1 : index
    %3 = vector.load %arg2[%c0_5, %c0_6, %c0_7, %c1] : memref<1x1x16x342xbf16, #tpu.memory_space<vmem>>, vector<1x1x16x288xbf16>
    %4 = vector.shape_cast %3 : vector<1x1x16x288xbf16> to vector<16x288xbf16>
    %c16 = arith.constant 16 : index
    %c0_8 = arith.constant 0 : index
    %5 = vector.load %arg6[%c16, %c0_8] : memref<144x288xbf16, #tpu.memory_space<vmem>>, vector<16x288xbf16>
    tpu.vector_store %arg6[%c16, %c0_8], %4 {strides = array<i32>} : memref<144x288xbf16, #tpu.memory_space<vmem>>, vector<16x288xbf16>,
    %c0_9 = arith.constant 0 : index
    %c0_10 = arith.constant 0 : index
    %c0_11 = arith.constant 0 : index
    %c2 = arith.constant 2 : index
    %6 = vector.load %arg2[%c0_9, %c0_10, %c0_11, %c2] : memref<1x1x16x342xbf16, #tpu.memory_space<vmem>>, vector<1x1x16x288xbf16>
    %7 = vector.shape_cast %6 : vector<1x1x16x288xbf16> to vector<16x288xbf16>
    %c32 = arith.constant 32 : index
    %c0_12 = arith.constant 0 : index
    %8 = vector.load %arg6[%c32, %c0_12] : memref<144x288xbf16, #tpu.memory_space<vmem>>, vector<16x288xbf16>
    tpu.vector_store %arg6[%c32, %c0_12], %7 {strides = array<i32>} : memref<144x288xbf16, #tpu.memory_space<vmem>>, vector<16x288xbf16>,
    %c0_13 = arith.constant 0 : index
    %c0_14 = arith.constant 0 : index
    %c0_15 = arith.constant 0 : index
    %c18 = arith.constant 18 : index
    %9 = vector.load %arg2[%c0_13, %c0_14, %c0_15, %c18] : memref<1x1x16x342xbf16, #tpu.memory_space<vmem>>, vector<1x1x16x288xbf16>
    %10 = vector.shape_cast %9 : vector<1x1x16x288xbf16> to vector<16x288xbf16>
    %c48 = arith.constant 48 : index
    %c0_16 = arith.constant 0 : index
    %11 = vector.load %arg6[%c48, %c0_16] : memref<144x288xbf16, #tpu.memory_space<vmem>>, vector<16x288xbf16>
    tpu.vector_store %arg6[%c48, %c0_16], %10 {strides = array<i32>} : memref<144x288xbf16, #tpu.memory_space<vmem>>, vector<16x288xbf16>,
    %c0_17 = arith.constant 0 : index
    %c0_18 = arith.constant 0 : index
    %c0_19 = arith.constant 0 : index
    %c19 = arith.constant 19 : index
    %12 = vector.load %arg2[%c0_17, %c0_18, %c0_19, %c19] : memref<1x1x16x342xbf16, #tpu.memory_space<vmem>>, vector<1x1x16x288xbf16>
    %13 = vector.shape_cast %12 : vector<1x1x16x288xbf16> to vector<16x288xbf16>
    %c64 = arith.constant 64 : index
    %c0_20 = arith.constant 0 : index
    %14 = vector.load %arg6[%c64, %c0_20] : memref<144x288xbf16, #tpu.memory_space<vmem>>, vector<16x288xbf16>
    tpu.vector_store %arg6[%c64, %c0_20], %13 {strides = array<i32>} : memref<144x288xbf16, #tpu.memory_space<vmem>>, vector<16x288xbf16>,
    %c0_21 = arith.constant 0 : index
    %c0_22 = arith.constant 0 : index
    %c0_23 = arith.constant 0 : index
    %c20 = arith.constant 20 : index
    %15 = vector.load %arg2[%c0_21, %c0_22, %c0_23, %c20] : memref<1x1x16x342xbf16, #tpu.memory_space<vmem>>, vector<1x1x16x288xbf16>
    %16 = vector.shape_cast %15 : vector<1x1x16x288xbf16> to vector<16x288xbf16>
    %c80 = arith.constant 80 : index
    %c0_24 = arith.constant 0 : index
    %17 = vector.load %arg6[%c80, %c0_24] : memref<144x288xbf16, #tpu.memory_space<vmem>>, vector<16x288xbf16>
    tpu.vector_store %arg6[%c80, %c0_24], %16 {strides = array<i32>} : memref<144x288xbf16, #tpu.memory_space<vmem>>, vector<16x288xbf16>,
    %c0_25 = arith.constant 0 : index
    %c0_26 = arith.constant 0 : index
    %c0_27 = arith.constant 0 : index
    %c36 = arith.constant 36 : index
    %18 = vector.load %arg2[%c0_25, %c0_26, %c0_27, %c36] : memref<1x1x16x342xbf16, #tpu.memory_space<vmem>>, vector<1x1x16x288xbf16>
    %19 = vector.shape_cast %18 : vector<1x1x16x288xbf16> to vector<16x288xbf16>
    %c96 = arith.constant 96 : index
    %c0_28 = arith.constant 0 : index
    %20 = vector.load %arg6[%c96, %c0_28] : memref<144x288xbf16, #tpu.memory_space<vmem>>, vector<16x288xbf16>
    tpu.vector_store %arg6[%c96, %c0_28], %19 {strides = array<i32>} : memref<144x288xbf16, #tpu.memory_space<vmem>>, vector<16x288xbf16>,
    %c0_29 = arith.constant 0 : index
    %c0_30 = arith.constant 0 : index
    %c0_31 = arith.constant 0 : index
    %c37 = arith.constant 37 : index
    %21 = vector.load %arg2[%c0_29, %c0_30, %c0_31, %c37] : memref<1x1x16x342xbf16, #tpu.memory_space<vmem>>, vector<1x1x16x288xbf16>
    %22 = vector.shape_cast %21 : vector<1x1x16x288xbf16> to vector<16x288xbf16>
    %c112 = arith.constant 112 : index
    %c0_32 = arith.constant 0 : index
    %23 = vector.load %arg6[%c112, %c0_32] : memref<144x288xbf16, #tpu.memory_space<vmem>>, vector<16x288xbf16>
    tpu.vector_store %arg6[%c112, %c0_32], %22 {strides = array<i32>} : memref<144x288xbf16, #tpu.memory_space<vmem>>, vector<16x288xbf16>,
    %c0_33 = arith.constant 0 : index
    %c0_34 = arith.constant 0 : index
    %c0_35 = arith.constant 0 : index
    %c38 = arith.constant 38 : index
    %24 = vector.load %arg2[%c0_33, %c0_34, %c0_35, %c38] : memref<1x1x16x342xbf16, #tpu.memory_space<vmem>>, vector<1x1x16x288xbf16>
    %25 = vector.shape_cast %24 : vector<1x1x16x288xbf16> to vector<16x288xbf16>
    %c128 = arith.constant 128 : index
    %c0_36 = arith.constant 0 : index
    %26 = vector.load %arg6[%c128, %c0_36] : memref<144x288xbf16, #tpu.memory_space<vmem>>, vector<16x288xbf16>
    tpu.vector_store %arg6[%c128, %c0_36], %25 {strides = array<i32>} : memref<144x288xbf16, #tpu.memory_space<vmem>>, vector<16x288xbf16>,
    %c0_37 = arith.constant 0 : index
    %c0_38 = arith.constant 0 : index
    %27 = vector.load %arg3[%c0_37, %c0_38] : memref<128x144xbf16, #tpu.memory_space<vmem>>, vector<128x144xbf16>
    %c0_39 = arith.constant 0 : index
    %c0_40 = arith.constant 0 : index
    %28 = vector.load %arg6[%c0_39, %c0_40] : memref<144x288xbf16, #tpu.memory_space<vmem>>, vector<144x288xbf16>
    %cst = arith.constant dense<0.000000e+00> : vector<128x288xf32>
    %29 = tpu.matmul %27, %28, %cst {dimension_numbers = #tpu.dot_dimension_numbers<[1], [0], [0], [1], [0, 0, 1, 1], [], []>} : vector<128x144xbf16>, vector<144x288xbf16>, vector<128x288xf32> -> vector<128x288xf32>
    %c0_41 = arith.constant 0 : index
    %c0_42 = arith.constant 0 : index
    %30 = vector.load %arg4[%c0_41, %c0_42] : memref<128x1xf32, #tpu.memory_space<vmem>>, vector<128x1xf32>
    %31 = vector.broadcast %30 : vector<128x1xf32> to vector<128x288xf32>
    %32 = arith.addf %29, %31 : vector<128x288xf32>
    %cst_43 = arith.constant 0.000000e+00 : f32
    %33 = vector.broadcast %cst_43 : f32 to vector<128x288xf32>
    %34 = arith.maximumf %32, %33 : vector<128x288xf32>
    %35 = vector.extract_strided_slice %34 {offsets = [0, 0], sizes = [8, 288], strides = [1, 1]} : vector<128x288xf32> to vector<8x288xf32>
    %c0_44 = arith.constant 0 : index
    %c0_45 = arith.constant 0 : index
    %c0_46 = arith.constant 0 : index
    %c0_47 = arith.constant 0 : index
    %36 = vector.load %arg5[%c0_44, %c0_45, %c0_46, %c0_47] : memref<1x1x8x288xf32, #tpu.memory_space<vmem>>, vector<1x1x8x288xf32>
    %37 = vector.shape_cast %36 : vector<1x1x8x288xf32> to vector<8x288xf32>
    %38 = vector.shape_cast %35 : vector<8x288xf32> to vector<1x1x8x288xf32>
    tpu.vector_store %arg5[%c0_44, %c0_45, %c0_46, %c0_47], %38 {strides = array<i32>} : memref<1x1x8x288xf32, #tpu.memory_space<vmem>>, vector<1x1x8x288xf32>,
    return
  }
  func.func @transform_0(%arg0: i32, %arg1: i32) -> (i32, i32, i32, i32) {
    %c0_i32 = arith.constant 0 : i32
    %c0_i32_0 = arith.constant 0 : i32
    %c0_i32_1 = arith.constant 0 : i32
    return %arg0, %arg1, %c0_i32, %c0_i32_0 : i32, i32, i32, i32
  }
  func.func @transform_1(%arg0: i32, %arg1: i32) -> (i32, i32) {
    %c0_i32 = arith.constant 0 : i32
    %c0_i32_0 = arith.constant 0 : i32
    %c0_i32_1 = arith.constant 0 : i32
    return %c0_i32, %c0_i32_0 : i32, i32
  }
  func.func @transform_2(%arg0: i32, %arg1: i32) -> (i32, i32) {
    %c0_i32 = arith.constant 0 : i32
    %c0_i32_0 = arith.constant 0 : i32
    %c0_i32_1 = arith.constant 0 : i32
    return %c0_i32, %c0_i32_0 : i32, i32
  }
  func.func @transform_3(%arg0: i32, %arg1: i32) -> (i32, i32, i32, i32) {
    %c0_i32 = arith.constant 0 : i32
    %c0_i32_0 = arith.constant 0 : i32
    %c0_i32_1 = arith.constant 0 : i32
    return %arg0, %arg1, %c0_i32, %c0_i32_0 : i32, i32, i32, i32
  }
}

</mosaic_0001>

<llo_original>
// kernel: tpu_custom_call.1
$region0: #{tpu_custom_call.1}
  #allocation0 [shape = 'u32[]', space=smem, size = 0x4, offset = 0x4, fixed_abs, tag = 'smem constant byte address 0x4 - core index']
  #allocation1 [shape = 'u32[144,128]{1,0:T(1,128)}', space=vmem, size = 0x12000, scoped, tag = 'internal scratch']
  #allocation2 [shape = 'bf16[144,288]{1,0:T(8,128)(2,1)}', space=vmem, size = 0x1b000, scoped, tag = 'scratch operand']
  %s0 = inlined_call_operand.vmem [shape: bf16[2,1,16,342], index: 0, kind: input, shape index: {}]
  %s1 = inlined_call_operand.vmem [shape: bf16[128,144], index: 1, kind: input, shape index: {}]
  %s2 = inlined_call_operand.vmem [shape: f32[128,1], index: 2, kind: input, shape index: {}]
  %s3 = inlined_call_operand.hbm [shape: f32[2,1,8,288], index: 3, kind: output, shape index: {}]
  %s4 = sld [smem:[#allocation0]]
  $region45: #{tpu_custom_call.1} parent=0
    _
  %s6 = ssub.s32 1, %s4
  %s7 = scalar_select 0, %s6, %s4
  $region1: #{tpu_custom_call.1} parent=0
    #allocation3 [shape = 'u8[24576]{0}', space=vmem, size = 0x6000, scoped, tag = 'output window, operand 0']
    #allocation4 [shape = 's32[2]{0}', space=sflag, size = 0x8, scoped, tag = 'scoped memory for tpu_custom_call.1']
    %8 = vsyncpa [#allocation4], 0
    %s9 = scalar_lea.sflag [#allocation4], 1
    %10 = vsyncpa %s9, 0
    loop: start=0, step=1, limit=4
    $region2: #{tpu_custom_call.1} parent=1 // loop_pre_header
      _
    $region3: #{tpu_custom_call.1} parent=1 // loop_header
      %s12 = sphi 0, %s16
      %p13 = scmp.ge.s32.totalorder %s12, 4
      %s19 = sphi 0, %s31
      %s20 = sphi 0, %s27
      %s21 = sphi 0, %s19
      %s22 = sphi 0, %s20
      %s23 = sphi 0, %s21
      %s24 = sphi 0, %s22
      %s36 = sphi 0, %s38
      %s39 = sphi 0, %s36
      %s40 = sphi 0, %s39
      %s56 = sphi 0, %s40
      %s60 = sphi 0, %s60
      %s62 = sphi 0, %s60
      %s63 = sphi 0, %s62
      %s77 = sphi 0, %s63
      %s81 = sphi 0, %s81
      %s83 = sphi 0, %s81
      %s84 = sphi 0, %s83
      %s98 = sphi 0, %s84
      %s106 = sphi 0, %s108
      %s109 = sphi 0, %s106
      %s110 = sphi 0, %s109
      %s126 = sphi 0, %s110
    $region4: #{tpu_custom_call.1} parent=1 // loop_header_branch
      %15 = sbr.rel (%p13) target = $region8
    $region5: #{tpu_custom_call.1} parent=1 // loop_body
      %s17 = ssub.s32 %s12, 1
      %s18 = ssub.s32 %s12, 2
      %s25 = sadd.s32 1, %s20
      %p26 = scmp.ge.s32.totalorder %s25, 1
      %s27 = scalar_select %p26, 0, %s25
      %s28 = sadd.s32 1, %s19
      %s29 = scalar_select %p26, %s28, %s19
      %p30 = scmp.ge.s32.totalorder %s29, 2
      %s31 = scalar_select %p30, 0, %s29
      %s32 = ssub.s32 %s19, %s31
      %s33 = ssub.s32 %s20, %s27
      %s34 = sor.u32 %s32, %s33
      %p35 = scmp.eq.s32.totalorder %s34, 0
      %s37 = sadd.s32 %s36, 1
      %s38 = scalar_select %p35, %s36, %s37
      %p41 = pneg %p35
      %p42 = scmp.eq.s32.totalorder %s12, 1
      %p43 = por %p41, %p42
      %p44 = scmp.ne.s32.totalorder %s36, %s39
      %p45 = scmp.eq.s32.totalorder %s12, 0
      %p46 = por %p44, %p45
      %p47 = scmp.ne.s32.totalorder %s36, %s39
      %p48 = scmp.eq.s32.totalorder %s17, 1
      %p49 = por %p47, %p48
      %p50 = scmp.ne.s32.totalorder %s39, %s40
      %p51 = scmp.eq.s32.totalorder %s17, 0
      %p52 = por %p50, %p51
      %p53 = scmp.ne.s32.totalorder %s39, %s40
      %p54 = scmp.eq.s32.totalorder %s18, 1
      %p55 = por %p53, %p54
      %p57 = scmp.ne.s32.totalorder %s40, %s56
      %p58 = scmp.eq.s32.totalorder %s18, 0
      %p59 = por %p57, %p58
      %s61 = sadd.s32 %s60, 1
      %p64 = scmp.eq.s32.totalorder %s12, 1
      %p65 = scmp.ne.s32.totalorder %s60, %s62
      %p66 = scmp.eq.s32.totalorder %s12, 0
      %p67 = por %p65, %p66
      %p68 = scmp.ne.s32.totalorder %s60, %s62
      %p69 = scmp.eq.s32.totalorder %s17, 1
      %p70 = por %p68, %p69
      %p71 = scmp.ne.s32.totalorder %s62, %s63
      %p72 = scmp.eq.s32.totalorder %s17, 0
      %p73 = por %p71, %p72
      %p74 = scmp.ne.s32.totalorder %s62, %s63
      %p75 = scmp.eq.s32.totalorder %s18, 1
      %p76 = por %p74, %p75
      %p78 = scmp.ne.s32.totalorder %s63, %s77
      %p79 = scmp.eq.s32.totalorder %s18, 0
      %p80 = por %p78, %p79
      %s82 = sadd.s32 %s81, 1
      %p85 = scmp.eq.s32.totalorder %s12, 1
      %p86 = scmp.ne.s32.totalorder %s81, %s83
      %p87 = scmp.eq.s32.totalorder %s12, 0
      %p88 = por %p86, %p87
      %p89 = scmp.ne.s32.totalorder %s81, %s83
      %p90 = scmp.eq.s32.totalorder %s17, 1
      %p91 = por %p89, %p90
      %p92 = scmp.ne.s32.totalorder %s83, %s84
      %p93 = scmp.eq.s32.totalorder %s17, 0
      %p94 = por %p92, %p93
      %p95 = scmp.ne.s32.totalorder %s83, %s84
      %p96 = scmp.eq.s32.totalorder %s18, 1
      %p97 = por %p95, %p96
      %p99 = scmp.ne.s32.totalorder %s84, %s98
      %p100 = scmp.eq.s32.totalorder %s18, 0
      %p101 = por %p99, %p100
      %s102 = ssub.s32 %s19, %s31
      %s103 = ssub.s32 %s20, %s27
      %s104 = sor.u32 %s102, %s103
      %p105 = scmp.eq.s32.totalorder %s104, 0
      %s107 = sadd.s32 %s106, 1
      %s108 = scalar_select %p105, %s106, %s107
      %p111 = pneg %p105
      %p112 = scmp.eq.s32.totalorder %s12, 1
      %p113 = por %p111, %p112
      %p114 = scmp.ne.s32.totalorder %s106, %s109
      %p115 = scmp.eq.s32.totalorder %s12, 0
      %p116 = por %p114, %p115
      %p117 = scmp.ne.s32.totalorder %s106, %s109
      %p118 = scmp.eq.s32.totalorder %s17, 1
      %p119 = por %p117, %p118
      %p120 = scmp.ne.s32.totalorder %s109, %s110
      %p121 = scmp.eq.s32.totalorder %s17, 0
      %p122 = por %p120, %p121
      %p123 = scmp.ne.s32.totalorder %s109, %s110
      %p124 = scmp.eq.s32.totalorder %s18, 1
      %p125 = por %p123, %p124
      %p127 = scmp.ne.s32.totalorder %s110, %s126
      %p128 = scmp.eq.s32.totalorder %s18, 0
      %p129 = por %p127, %p128
      %p130 = scmp.le.s32.totalorder 1, %s12
      %p131 = scmp.lt.s32.totalorder %s12, 3
      %p132 = pnand %p130, %p131
      %p133 = pneg %p132
      // Predicated region
      $region9: #{tpu_custom_call.1} parent=5 // pred_check
        _
      $region10: #{tpu_custom_call.1} parent=5 // pred_check_branch
        %135 = sbr.rel (%p132) target = $region12
      $region11: #{tpu_custom_call.1} parent=5 // pred_region
        %s136 = ssub.s32 %s12, 1
        // Predicated region
        $region13: #{tpu_custom_call.1} parent=11 // pred_check
          %p137 = pneg %p73
        $region14: #{tpu_custom_call.1} parent=11 // pred_check_branch
          %139 = sbr.rel (%p137) target = $region16
        $region15: #{tpu_custom_call.1} parent=11 // pred_region
          _
        $region16: #{tpu_custom_call.1} parent=11 // pred_fallthru
          _
        // Predicated region
        $region17: #{tpu_custom_call.1} parent=11 // pred_check
          %p140 = pneg %p94
        $region18: #{tpu_custom_call.1} parent=11 // pred_check_branch
          %142 = sbr.rel (%p140) target = $region20
        $region19: #{tpu_custom_call.1} parent=11 // pred_region
          _
        $region20: #{tpu_custom_call.1} parent=11 // pred_fallthru
          _
      $region12: #{tpu_custom_call.1} parent=5 // pred_fallthru
        _
      %p143 = scmp.lt.s32.totalorder %s12, 2
      // Predicated region
      $region21: #{tpu_custom_call.1} parent=5 // pred_check
        %p144 = pneg %p143
      $region22: #{tpu_custom_call.1} parent=5 // pred_check_branch
        %146 = sbr.rel (%p144) target = $region24
      $region23: #{tpu_custom_call.1} parent=5 // pred_region
        // Predicated region
        $region25: #{tpu_custom_call.1} parent=23 // pred_check
          %p147 = pneg %p46
        $region26: #{tpu_custom_call.1} parent=23 // pred_check_branch
          %149 = sbr.rel (%p147) target = $region28
        $region27: #{tpu_custom_call.1} parent=23 // pred_region
          %p150 = scmp.lt.s32.totalorder %s19, 1
          %s151 = scalar_select %p150, %s19, 1
          %p152 = scmp.lt.s32.totalorder %s20, 0
          %s153 = scalar_select %p152, %s20, 0
          %s154 = smul.addr %s153, 6
          %s155 = smul.addr %s151, 6
          %s156 = sadd.s32 %s154, %s155
          %s157 = smul.addr %s156, 4
          %s158 = scalar_lea.vmem %s0, %s157
        $region28: #{tpu_custom_call.1} parent=23 // pred_fallthru
          _
      $region24: #{tpu_custom_call.1} parent=5 // pred_fallthru
        _
      %p159 = scmp.le.s32.totalorder 1, %s12
      %p160 = scmp.lt.s32.totalorder %s12, 3
      %p161 = pnand %p159, %p160
      %p162 = pneg %p161
      // Predicated region
      $region29: #{tpu_custom_call.1} parent=5 // pred_check
        _
      $region30: #{tpu_custom_call.1} parent=5 // pred_check_branch
        %164 = sbr.rel (%p161) target = $region32
      $region31: #{tpu_custom_call.1} parent=5 // pred_region
        %s165 = ssub.s32 %s12, 1
        %p166 = scmp.lt.s32.totalorder %s21, 1
        %s167 = scalar_select %p166, %s21, 1
        %p168 = scmp.lt.s32.totalorder %s22, 0
        %s169 = scalar_select %p168, %s22, 0
        %s170 = smul.addr %s169, 6
        %s171 = smul.addr %s167, 6
        %s172 = sadd.s32 %s170, %s171
        %s173 = smul.addr %s172, 4
        %s174 = scalar_lea.vmem %s0, %s173
        %p175 = pneg %p52
        %p176 = pneg %p49
        %p177 = pneg %p73
        %p178 = pneg %p70
        %p179 = pneg %p94
        %p180 = pneg %p91
        %p181 = pneg %p122
        %p182 = pneg %p119
        %s183 = sand.u32 %s109, 1
        %s184 = scalar_lea.sflag [#allocation4], %s183
        %s185 = sand.u32 %s109, 1
        %s186 = smul.addr %s185, 24
        %s187 = scalar_lea.vmem [#allocation3], %s186
        %p188 = scmp.lt.s32.totalorder %s21, 1
        %s189 = scalar_select %p188, %s21, 1
        %p190 = scmp.lt.s32.totalorder %s22, 0
        %s191 = scalar_select %p190, %s22, 0
        %s192 = smul.addr %s191, 6
        %s193 = smul.addr %s189, 6
        %s194 = sadd.s32 %s192, %s193
        %s195 = smul.addr %s194, 4
        %s196 = scalar_lea.vmem %s0, %s195
        %v198 = vld [vmem:[%s196] sm:$0xff]
        %v199 = vld [vmem:[%s196 + $0x8] sm:$0xf]
        %v200 = vld [vmem:[%s196 + $0xc] sm:$0xff]
        %v201 = vld [vmem:[%s196 + $0x14] sm:$0xf]
        %202 = vst [vmem:[#allocation2] sm:$0xff] %v198
        %vm203 = vcmask 257024
        %204 = vst.msk [vmem:[#allocation2 + $0x8] sm:$0xf] %vm203, %v199
        %205 = vst [vmem:[#allocation2 + $0xc] sm:$0xff] %v200
        %206 = vst.msk [vmem:[#allocation2 + $0x14] sm:$0xf] %vm203, %v201
        %v207 = vld [vmem:[%s196] sm:$0xff]
        %v208 = vld [vmem:[%s196 + $0x8] sm:$0xf]
        %v209 = vld [vmem:[%s196 + $0xc] sm:$0xff]
        %v210 = vld [vmem:[%s196 + $0x14] sm:$0xf]
        %215 = vrot.lane.b32.xlu0 %v207, 127
        %v216 = vpop.permute.xlu0 %215
        %217 = vrot.lane.b32.xlu0 %v208, 127
        %v218 = vpop.permute.xlu0 %217
        %219 = vrot.lane.b32.xlu0 %v209, 127
        %v220 = vpop.permute.xlu0 %219
        %221 = vrot.lane.b32.xlu0 %v210, 127
        %v222 = vpop.permute.xlu0 %221
        %v223 = vrot.slane %v216, 4
        %v224 = vrot.slane %v218, 4
        %v225 = vrot.slane %v220, 4
        %v226 = vrot.slane %v222, 4
        %vm227 = vcmask 1043456
        %v228 = vsel %vm227, %v223, %v224
        %vm229 = vcmask 1039360
        %v230 = vsel %vm229, %v216, %v228
        %v231 = vsel %vm227, %v225, %v226
        %v232 = vsel %vm229, %v220, %v231
        %237 = vst [vmem:[#allocation2 + $0x18] sm:$0xff] %v230
        %238 = vst.msk [vmem:[#allocation2 + $0x20] sm:$0xf] %vm203, %v218
        %239 = vst [vmem:[#allocation2 + $0x24] sm:$0xff] %v232
        %240 = vst.msk [vmem:[#allocation2 + $0x2c] sm:$0xf] %vm203, %v222
        %v241 = vld [vmem:[%s196] sm:$0xff]
        %v242 = vld [vmem:[%s196 + $0x8] sm:$0xf]
        %v243 = vld [vmem:[%s196 + $0xc] sm:$0xff]
        %v244 = vld [vmem:[%s196 + $0x14] sm:$0xf]
        %249 = vrot.lane.b32.xlu0 %v241, 126
        %v250 = vpop.permute.xlu0 %249
        %251 = vrot.lane.b32.xlu0 %v242, 126
        %v252 = vpop.permute.xlu0 %251
        %253 = vrot.lane.b32.xlu0 %v243, 126
        %v254 = vpop.permute.xlu0 %253
        %255 = vrot.lane.b32.xlu0 %v244, 126
        %v256 = vpop.permute.xlu0 %255
        %v257 = vrot.slane %v250, 4
        %v258 = vrot.slane %v252, 4
        %v259 = vrot.slane %v254, 4
        %v260 = vrot.slane %v256, 4
        %v261 = vsel %vm227, %v257, %v258
        %vm262 = vcmask 1031168
        %v263 = vsel %vm262, %v250, %v261
        %v264 = vsel %vm227, %v259, %v260
        %v265 = vsel %vm262, %v254, %v264
        %270 = vst [vmem:[#allocation2 + $0x30] sm:$0xff] %v263
        %271 = vst.msk [vmem:[#allocation2 + $0x38] sm:$0xf] %vm203, %v252
        %272 = vst [vmem:[#allocation2 + $0x3c] sm:$0xff] %v265
        %273 = vst.msk [vmem:[#allocation2 + $0x44] sm:$0xf] %vm203, %v256
        %v274 = vld [vmem:[%s196] sm:$0xff]
        %v275 = vld [vmem:[%s196 + $0x8] sm:$0xf]
        %v276 = vld [vmem:[%s196 + $0xc] sm:$0xff]
        %v277 = vld [vmem:[%s196 + $0x14] sm:$0xf]
        %282 = vrot.lane.b32.xlu0 %v274, 110
        %v283 = vpop.permute.xlu0 %282
        %284 = vrot.lane.b32.xlu0 %v275, 110
        %v285 = vpop.permute.xlu0 %284
        %286 = vrot.lane.b32.xlu0 %v276, 110
        %v287 = vpop.permute.xlu0 %286
        %288 = vrot.lane.b32.xlu0 %v277, 110
        %v289 = vpop.permute.xlu0 %288
        %v290 = vrot.slane %v283, 4
        %v291 = vrot.slane %v285, 4
        %v292 = vrot.slane %v287, 4
        %v293 = vrot.slane %v289, 4
        %v294 = vsel %vm227, %v290, %v291
        %vm295 = vcmask 900096
        %v296 = vsel %vm295, %v283, %v294
        %v297 = vsel %vm227, %v292, %v293
        %v298 = vsel %vm295, %v287, %v297
        %303 = vst [vmem:[#allocation2 + $0x48] sm:$0xff] %v296
        %304 = vst.msk [vmem:[#allocation2 + $0x50] sm:$0xf] %vm203, %v285
        %305 = vst [vmem:[#allocation2 + $0x54] sm:$0xff] %v298
        %306 = vst.msk [vmem:[#allocation2 + $0x5c] sm:$0xf] %vm203, %v289
        %v307 = vld [vmem:[%s196] sm:$0xff]
        %v308 = vld [vmem:[%s196 + $0x8] sm:$0xf]
        %v309 = vld [vmem:[%s196 + $0xc] sm:$0xff]
        %v310 = vld [vmem:[%s196 + $0x14] sm:$0xf]
        %315 = vrot.lane.b32.xlu0 %v307, 109
        %v316 = vpop.permute.xlu0 %315
        %317 = vrot.lane.b32.xlu0 %v308, 109
        %v318 = vpop.permute.xlu0 %317
        %319 = vrot.lane.b32.xlu0 %v309, 109
        %v320 = vpop.permute.xlu0 %319
        %321 = vrot.lane.b32.xlu0 %v310, 109
        %v322 = vpop.permute.xlu0 %321
        %v323 = vrot.slane %v316, 4
        %v324 = vrot.slane %v318, 4
        %v325 = vrot.slane %v320, 4
        %v326 = vrot.slane %v322, 4
        %v327 = vsel %vm227, %v323, %v324
        %vm328 = vcmask 891904
        %v329 = vsel %vm328, %v316, %v327
        %v330 = vsel %vm227, %v325, %v326
        %v331 = vsel %vm328, %v320, %v330
        %336 = vst [vmem:[#allocation2 + $0x60] sm:$0xff] %v329
        %337 = vst.msk [vmem:[#allocation2 + $0x68] sm:$0xf] %vm203, %v318
        %338 = vst [vmem:[#allocation2 + $0x6c] sm:$0xff] %v331
        %339 = vst.msk [vmem:[#allocation2 + $0x74] sm:$0xf] %vm203, %v322
        %v340 = vld [vmem:[%s196] sm:$0xff]
        %v341 = vld [vmem:[%s196 + $0x8] sm:$0xf]
        %v342 = vld [vmem:[%s196 + $0xc] sm:$0xff]
        %v343 = vld [vmem:[%s196 + $0x14] sm:$0xf]
        %348 = vrot.lane.b32.xlu0 %v340, 108
        %v349 = vpop.permute.xlu0 %348
        %350 = vrot.lane.b32.xlu0 %v341, 108
        %v351 = vpop.permute.xlu0 %350
        %352 = vrot.lane.b32.xlu0 %v342, 108
        %v353 = vpop.permute.xlu0 %352
        %354 = vrot.lane.b32.xlu0 %v343, 108
        %v355 = vpop.permute.xlu0 %354
        %v356 = vrot.slane %v349, 4
        %v357 = vrot.slane %v351, 4
        %v358 = vrot.slane %v353, 4
        %v359 = vrot.slane %v355, 4
        %v360 = vsel %vm227, %v356, %v357
        %vm361 = vcmask 883712
        %v362 = vsel %vm361, %v349, %v360
        %v363 = vsel %vm227, %v358, %v359
        %v364 = vsel %vm361, %v353, %v363
        %369 = vst [vmem:[#allocation2 + $0x78] sm:$0xff] %v362
        %370 = vst.msk [vmem:[#allocation2 + $0x80] sm:$0xf] %vm203, %v351
        %371 = vst [vmem:[#allocation2 + $0x84] sm:$0xff] %v364
        %372 = vst.msk [vmem:[#allocation2 + $0x8c] sm:$0xf] %vm203, %v355
        %v373 = vld [vmem:[%s196] sm:$0xff]
        %v374 = vld [vmem:[%s196 + $0x8] sm:$0xf]
        %v375 = vld [vmem:[%s196 + $0xc] sm:$0xff]
        %v376 = vld [vmem:[%s196 + $0x14] sm:$0xf]
        %381 = vrot.lane.b32.xlu0 %v373, 92
        %v382 = vpop.permute.xlu0 %381
        %383 = vrot.lane.b32.xlu0 %v374, 92
        %v384 = vpop.permute.xlu0 %383
        %385 = vrot.lane.b32.xlu0 %v375, 92
        %v386 = vpop.permute.xlu0 %385
        %387 = vrot.lane.b32.xlu0 %v376, 92
        %v388 = vpop.permute.xlu0 %387
        %v389 = vrot.slane %v382, 4
        %v390 = vrot.slane %v384, 4
        %v391 = vrot.slane %v386, 4
        %v392 = vrot.slane %v388, 4
        %v393 = vsel %vm227, %v389, %v390
        %vm394 = vcmask 752640
        %v395 = vsel %vm394, %v382, %v393
        %v396 = vsel %vm227, %v391, %v392
        %v397 = vsel %vm394, %v386, %v396
        %402 = vst [vmem:[#allocation2 + $0x90] sm:$0xff] %v395
        %403 = vst.msk [vmem:[#allocation2 + $0x98] sm:$0xf] %vm203, %v384
        %404 = vst [vmem:[#allocation2 + $0x9c] sm:$0xff] %v397
        %405 = vst.msk [vmem:[#allocation2 + $0xa4] sm:$0xf] %vm203, %v388
        %v406 = vld [vmem:[%s196] sm:$0xff]
        %v407 = vld [vmem:[%s196 + $0x8] sm:$0xf]
        %v408 = vld [vmem:[%s196 + $0xc] sm:$0xff]
        %v409 = vld [vmem:[%s196 + $0x14] sm:$0xf]
        %414 = vrot.lane.b32.xlu0 %v406, 91
        %v415 = vpop.permute.xlu0 %414
        %416 = vrot.lane.b32.xlu0 %v407, 91
        %v417 = vpop.permute.xlu0 %416
        %418 = vrot.lane.b32.xlu0 %v408, 91
        %v419 = vpop.permute.xlu0 %418
        %420 = vrot.lane.b32.xlu0 %v409, 91
        %v421 = vpop.permute.xlu0 %420
        %v422 = vrot.slane %v415, 4
        %v423 = vrot.slane %v417, 4
        %v424 = vrot.slane %v419, 4
        %v425 = vrot.slane %v421, 4
        %v426 = vsel %vm227, %v422, %v423
        %vm427 = vcmask 744448
        %v428 = vsel %vm427, %v415, %v426
        %v429 = vsel %vm227, %v424, %v425
        %v430 = vsel %vm427, %v419, %v429
        %435 = vst [vmem:[#allocation2 + $0xa8] sm:$0xff] %v428
        %436 = vst.msk [vmem:[#allocation2 + $0xb0] sm:$0xf] %vm203, %v417
        %437 = vst [vmem:[#allocation2 + $0xb4] sm:$0xff] %v430
        %438 = vst.msk [vmem:[#allocation2 + $0xbc] sm:$0xf] %vm203, %v421
        %v439 = vld [vmem:[%s196] sm:$0xff]
        %v440 = vld [vmem:[%s196 + $0x8] sm:$0xf]
        %v441 = vld [vmem:[%s196 + $0xc] sm:$0xff]
        %v442 = vld [vmem:[%s196 + $0x14] sm:$0xf]
        %447 = vrot.lane.b32.xlu0 %v439, 90
        %v448 = vpop.permute.xlu0 %447
        %449 = vrot.lane.b32.xlu0 %v440, 90
        %v450 = vpop.permute.xlu0 %449
        %451 = vrot.lane.b32.xlu0 %v441, 90
        %v452 = vpop.permute.xlu0 %451
        %453 = vrot.lane.b32.xlu0 %v442, 90
        %v454 = vpop.permute.xlu0 %453
        %v455 = vrot.slane %v448, 4
        %v456 = vrot.slane %v450, 4
        %v457 = vrot.slane %v452, 4
        %v458 = vrot.slane %v454, 4
        %v459 = vsel %vm227, %v455, %v456
        %vm460 = vcmask 736256
        %v461 = vsel %vm460, %v448, %v459
        %v462 = vsel %vm227, %v457, %v458
        %v463 = vsel %vm460, %v452, %v462
        %468 = vst [vmem:[#allocation2 + $0xc0] sm:$0xff] %v461
        %469 = vst.msk [vmem:[#allocation2 + $0xc8] sm:$0xf] %vm203, %v450
        %470 = vst [vmem:[#allocation2 + $0xcc] sm:$0xff] %v463
        %471 = vst.msk [vmem:[#allocation2 + $0xd4] sm:$0xf] %vm203, %v454
        %v472 = vld [vmem:[%s1] sm:$0xff]
        %v473 = vld [vmem:[%s1 + $0x8] sm:$0xff]
        %v474 = vld [vmem:[%s1 + $0x10] sm:$0xff]
        %v475 = vld [vmem:[%s1 + $0x18] sm:$0xff]
        %v476 = vld [vmem:[%s1 + $0x20] sm:$0xff]
        %v477 = vld [vmem:[%s1 + $0x28] sm:$0xff]
        %v478 = vld [vmem:[%s1 + $0x30] sm:$0xff]
        %v479 = vld [vmem:[%s1 + $0x38] sm:$0xff]
        %v480 = vld [vmem:[%s1 + $0x40] sm:$0xff]
        %v481 = vld [vmem:[%s1 + $0x48] sm:$0xff]
        %v482 = vld [vmem:[%s1 + $0x50] sm:$0xff]
        %v483 = vld [vmem:[%s1 + $0x58] sm:$0xff]
        %v484 = vld [vmem:[%s1 + $0x60] sm:$0xff]
        %v485 = vld [vmem:[%s1 + $0x68] sm:$0xff]
        %v486 = vld [vmem:[%s1 + $0x70] sm:$0xff]
        %v487 = vld [vmem:[%s1 + $0x78] sm:$0xff]
        %v488 = vld [vmem:[#allocation2] sm:$0xff]
        %v489 = vld [vmem:[#allocation2 + $0x8] sm:$0xf]
        %v490 = vld [vmem:[#allocation2 + $0xc] sm:$0xff]
        %v491 = vld [vmem:[#allocation2 + $0x14] sm:$0xf]
        %v492 = vld [vmem:[#allocation2 + $0x18] sm:$0xff]
        %v493 = vld [vmem:[#allocation2 + $0x20] sm:$0xf]
        %v494 = vld [vmem:[#allocation2 + $0x24] sm:$0xff]
        %v495 = vld [vmem:[#allocation2 + $0x2c] sm:$0xf]
        %v496 = vld [vmem:[#allocation2 + $0x30] sm:$0xff]
        %v497 = vld [vmem:[#allocation2 + $0x38] sm:$0xf]
        %v498 = vld [vmem:[#allocation2 + $0x3c] sm:$0xff]
        %v499 = vld [vmem:[#allocation2 + $0x44] sm:$0xf]
        %v500 = vld [vmem:[#allocation2 + $0x48] sm:$0xff]
        %v501 = vld [vmem:[#allocation2 + $0x50] sm:$0xf]
        %v502 = vld [vmem:[#allocation2 + $0x54] sm:$0xff]
        %v503 = vld [vmem:[#allocation2 + $0x5c] sm:$0xf]
        %v504 = vld [vmem:[#allocation2 + $0x60] sm:$0xff]
        %v505 = vld [vmem:[#allocation2 + $0x68] sm:$0xf]
        %v506 = vld [vmem:[#allocation2 + $0x6c] sm:$0xff]
        %v507 = vld [vmem:[#allocation2 + $0x74] sm:$0xf]
        %v508 = vld [vmem:[#allocation2 + $0x78] sm:$0xff]
        %v509 = vld [vmem:[#allocation2 + $0x80] sm:$0xf]
        %v510 = vld [vmem:[#allocation2 + $0x84] sm:$0xff]
        %v511 = vld [vmem:[#allocation2 + $0x8c] sm:$0xf]
        %v512 = vld [vmem:[#allocation2 + $0x90] sm:$0xff]
        %v513 = vld [vmem:[#allocation2 + $0x98] sm:$0xf]
        %v514 = vld [vmem:[#allocation2 + $0x9c] sm:$0xff]
        %v515 = vld [vmem:[#allocation2 + $0xa4] sm:$0xf]
        %v516 = vld [vmem:[#allocation2 + $0xa8] sm:$0xff]
        %v517 = vld [vmem:[#allocation2 + $0xb0] sm:$0xf]
        %v518 = vld [vmem:[#allocation2 + $0xb4] sm:$0xff]
        %v519 = vld [vmem:[#allocation2 + $0xbc] sm:$0xf]
        %v520 = vld [vmem:[#allocation2 + $0xc0] sm:$0xff]
        %v521 = vld [vmem:[#allocation2 + $0xc8] sm:$0xf]
        %v522 = vld [vmem:[#allocation2 + $0xcc] sm:$0xff]
        %v523 = vld [vmem:[#allocation2 + $0xd4] sm:$0xf]
        %v524 = vld [vmem:[%s2] sm:$0xff]
        %v525 = vld [vmem:[%s2 + $0x8] sm:$0xff]
        %v526 = vld [vmem:[%s2 + $0x10] sm:$0xff]
        %v527 = vld [vmem:[%s2 + $0x18] sm:$0xff]
        %v528 = vld [vmem:[%s2 + $0x20] sm:$0xff]
        %v529 = vld [vmem:[%s2 + $0x28] sm:$0xff]
        %v530 = vld [vmem:[%s2 + $0x30] sm:$0xff]
        %v531 = vld [vmem:[%s2 + $0x38] sm:$0xff]
        %v532 = vld [vmem:[%s2 + $0x40] sm:$0xff]
        %v533 = vld [vmem:[%s2 + $0x48] sm:$0xff]
        %v534 = vld [vmem:[%s2 + $0x50] sm:$0xff]
        %v535 = vld [vmem:[%s2 + $0x58] sm:$0xff]
        %v536 = vld [vmem:[%s2 + $0x60] sm:$0xff]
        %v537 = vld [vmem:[%s2 + $0x68] sm:$0xff]
        %v538 = vld [vmem:[%s2 + $0x70] sm:$0xff]
        %v539 = vld [vmem:[%s2 + $0x78] sm:$0xff]
        %541 = vset.pattern.permute.xlu0 0
        %542 = vperm.xlu0 %541, %v524
        %v543 = vpop.permute.xlu0 %542
        %546 = vset.pattern.permute.xlu0 0
        %547 = vperm.xlu0 %546, %v525
        %v548 = vpop.permute.xlu0 %547
        %550 = vset.pattern.permute.xlu0 0
        %551 = vperm.xlu0 %550, %v526
        %v552 = vpop.permute.xlu0 %551
        %554 = vset.pattern.permute.xlu0 0
        %555 = vperm.xlu0 %554, %v527
        %v556 = vpop.permute.xlu0 %555
        %558 = vset.pattern.permute.xlu0 0
        %559 = vperm.xlu0 %558, %v528
        %v560 = vpop.permute.xlu0 %559
        %562 = vset.pattern.permute.xlu0 0
        %563 = vperm.xlu0 %562, %v529
        %v564 = vpop.permute.xlu0 %563
        %566 = vset.pattern.permute.xlu0 0
        %567 = vperm.xlu0 %566, %v530
        %v568 = vpop.permute.xlu0 %567
        %570 = vset.pattern.permute.xlu0 0
        %571 = vperm.xlu0 %570, %v531
        %v572 = vpop.permute.xlu0 %571
        %574 = vset.pattern.permute.xlu0 0
        %575 = vperm.xlu0 %574, %v532
        %v576 = vpop.permute.xlu0 %575
        %578 = vset.pattern.permute.xlu0 0
        %579 = vperm.xlu0 %578, %v533
        %v580 = vpop.permute.xlu0 %579
        %582 = vset.pattern.permute.xlu0 0
        %583 = vperm.xlu0 %582, %v534
        %v584 = vpop.permute.xlu0 %583
        %586 = vset.pattern.permute.xlu0 0
        %587 = vperm.xlu0 %586, %v535
        %v588 = vpop.permute.xlu0 %587
        %590 = vset.pattern.permute.xlu0 0
        %591 = vperm.xlu0 %590, %v536
        %v592 = vpop.permute.xlu0 %591
        %594 = vset.pattern.permute.xlu0 0
        %595 = vperm.xlu0 %594, %v537
        %v596 = vpop.permute.xlu0 %595
        %598 = vset.pattern.permute.xlu0 0
        %599 = vperm.xlu0 %598, %v538
        %v600 = vpop.permute.xlu0 %599
        %602 = vset.pattern.permute.xlu0 0
        %603 = vperm.xlu0 %602, %v539
        %v604 = vpop.permute.xlu0 %603
        %v621 = vunpack.c.l.b16 %v472
        %v622 = vunpack.c.h.b16 %v472
        %v623 = vunpack.c.l.b16 %v473
        %v624 = vunpack.c.h.b16 %v473
        %v625 = vunpack.c.l.b16 %v474
        %v626 = vunpack.c.h.b16 %v474
        %v627 = vunpack.c.l.b16 %v475
        %v628 = vunpack.c.h.b16 %v475
        %v629 = vunpack.c.l.b16 %v476
        %v630 = vunpack.c.h.b16 %v476
        %v631 = vunpack.c.l.b16 %v477
        %v632 = vunpack.c.h.b16 %v477
        %v633 = vunpack.c.l.b16 %v478
        %v634 = vunpack.c.h.b16 %v478
        %v635 = vunpack.c.l.b16 %v479
        %v636 = vunpack.c.h.b16 %v479
        %v637 = vunpack.c.l.b16 %v480
        %v638 = vunpack.c.h.b16 %v480
        %v639 = vunpack.c.l.b16 %v481
        %v640 = vunpack.c.h.b16 %v481
        %v641 = vunpack.c.l.b16 %v482
        %v642 = vunpack.c.h.b16 %v482
        %v643 = vunpack.c.l.b16 %v483
        %v644 = vunpack.c.h.b16 %v483
        %v645 = vunpack.c.l.b16 %v484
        %v646 = vunpack.c.h.b16 %v484
        %v647 = vunpack.c.l.b16 %v485
        %v648 = vunpack.c.h.b16 %v485
        %v649 = vunpack.c.l.b16 %v486
        %v650 = vunpack.c.h.b16 %v486
        %v651 = vunpack.c.l.b16 %v487
        %v652 = vunpack.c.h.b16 %v487
        %v653 = vpack.c.b16 %v623, %v621
        %v654 = vpack.c.b16 %v624, %v622
        %v655 = vpack.c.b16 %v627, %v625
        %v656 = vpack.c.b16 %v628, %v626
        %v657 = vpack.c.b16 %v631, %v629
        %v658 = vpack.c.b16 %v632, %v630
        %v659 = vpack.c.b16 %v635, %v633
        %v660 = vpack.c.b16 %v636, %v634
        %v661 = vpack.c.b16 %v639, %v637
        %v662 = vpack.c.b16 %v640, %v638
        %v663 = vpack.c.b16 %v643, %v641
        %v664 = vpack.c.b16 %v644, %v642
        %v665 = vpack.c.b16 %v647, %v645
        %v666 = vpack.c.b16 %v648, %v646
        %v667 = vpack.c.b16 %v651, %v649
        %v668 = vpack.c.b16 %v652, %v650
        %v713 = vunpack.c.l.b16 %v488
        %v714 = vunpack.c.h.b16 %v488
        %v715 = vunpack.c.l.b16 %v489
        %v716 = vunpack.c.l.b16 %v490
        %v717 = vunpack.c.h.b16 %v490
        %v718 = vunpack.c.l.b16 %v491
        %v719 = vunpack.c.l.b16 %v492
        %v720 = vunpack.c.h.b16 %v492
        %v721 = vunpack.c.l.b16 %v493
        %v722 = vunpack.c.l.b16 %v494
        %v723 = vunpack.c.h.b16 %v494
        %v724 = vunpack.c.l.b16 %v495
        %v725 = vunpack.c.l.b16 %v496
        %v726 = vunpack.c.h.b16 %v496
        %v727 = vunpack.c.l.b16 %v497
        %v728 = vunpack.c.l.b16 %v498
        %v729 = vunpack.c.h.b16 %v498
        %v730 = vunpack.c.l.b16 %v499
        %v731 = vunpack.c.l.b16 %v500
        %v732 = vunpack.c.h.b16 %v500
        %v733 = vunpack.c.l.b16 %v501
        %v734 = vunpack.c.l.b16 %v502
        %v735 = vunpack.c.h.b16 %v502
        %v736 = vunpack.c.l.b16 %v503
        %v737 = vunpack.c.l.b16 %v504
        %v738 = vunpack.c.h.b16 %v504
        %v739 = vunpack.c.l.b16 %v505
        %v740 = vunpack.c.l.b16 %v506
        %v741 = vunpack.c.h.b16 %v506
        %v742 = vunpack.c.l.b16 %v507
        %v743 = vunpack.c.l.b16 %v508
        %v744 = vunpack.c.h.b16 %v508
        %v745 = vunpack.c.l.b16 %v509
        %v746 = vunpack.c.l.b16 %v510
        %v747 = vunpack.c.h.b16 %v510
        %v748 = vunpack.c.l.b16 %v511
        %v749 = vunpack.c.l.b16 %v512
        %v750 = vunpack.c.h.b16 %v512
        %v751 = vunpack.c.l.b16 %v513
        %v752 = vunpack.c.l.b16 %v514
        %v753 = vunpack.c.h.b16 %v514
        %v754 = vunpack.c.l.b16 %v515
        %v755 = vunpack.c.l.b16 %v516
        %v756 = vunpack.c.h.b16 %v516
        %v757 = vunpack.c.l.b16 %v517
        %v758 = vunpack.c.l.b16 %v518
        %v759 = vunpack.c.h.b16 %v518
        %v760 = vunpack.c.l.b16 %v519
        %v761 = vunpack.c.l.b16 %v520
        %v762 = vunpack.c.h.b16 %v520
        %v763 = vunpack.c.l.b16 %v521
        %v764 = vunpack.c.l.b16 %v522
        %v765 = vunpack.c.h.b16 %v522
        %v766 = vunpack.c.l.b16 %v523
        %v767 = vpack.c.b16 %v716, %v713
        %v768 = vpack.c.b16 %v717, %v714
        %v769 = vpack.c.b16 %v718, %v715
        %v770 = vpack.c.b16 %v722, %v719
        %v771 = vpack.c.b16 %v723, %v720
        %v772 = vpack.c.b16 %v724, %v721
        %v773 = vpack.c.b16 %v728, %v725
        %v774 = vpack.c.b16 %v729, %v726
        %v775 = vpack.c.b16 %v730, %v727
        %v776 = vpack.c.b16 %v734, %v731
        %v777 = vpack.c.b16 %v735, %v732
        %v778 = vpack.c.b16 %v736, %v733
        %v779 = vpack.c.b16 %v740, %v737
        %v780 = vpack.c.b16 %v741, %v738
        %v781 = vpack.c.b16 %v742, %v739
        %v782 = vpack.c.b16 %v746, %v743
        %v783 = vpack.c.b16 %v747, %v744
        %v784 = vpack.c.b16 %v748, %v745
        %v785 = vpack.c.b16 %v752, %v749
        %v786 = vpack.c.b16 %v753, %v750
        %v787 = vpack.c.b16 %v754, %v751
        %v788 = vpack.c.b16 %v758, %v755
        %v789 = vpack.c.b16 %v759, %v756
        %v790 = vpack.c.b16 %v760, %v757
        %v791 = vpack.c.b16 %v764, %v761
        %v792 = vpack.c.b16 %v765, %v762
        %v793 = vpack.c.b16 %v766, %v763
        %vm821 = vcmask 130048
        %v823 = vsel %vm821, %v654, 0
        %v826 = vsel %vm821, %v656, 0
        %v829 = vsel %vm821, %v658, 0
        %v832 = vsel %vm821, %v660, 0
        %v835 = vsel %vm821, %v662, 0
        %v838 = vsel %vm821, %v664, 0
        %v841 = vsel %vm821, %v666, 0
        %v844 = vsel %vm821, %v668, 0
        %846 = vmatprep.subr.bf16.mxu0 %v789
        %847 = vmatpush1.bf16.msra.mxu0 %v788
        %848 = vmatprep.subr.bf16.mxu0 %v786
        %849 = vmatpush1.bf16.msra.mxu0 %v785
        %850 = vmatprep.subr.bf16.mxu0 %v783
        %851 = vmatpush1.bf16.msra.mxu0 %v782
        %852 = vmatprep.subr.bf16.mxu0 %v780
        %853 = vmatpush1.bf16.msra.mxu0 %v779
        %854 = vmatprep.subr.bf16.mxu0 %v777
        %855 = vmatpush1.bf16.msra.mxu0 %v776
        %856 = vmatprep.subr.bf16.mxu0 %v774
        %857 = vmatpush1.bf16.msra.mxu0 %v773
        %858 = vmatprep.subr.bf16.mxu0 %v771
        %859 = vmatpush1.bf16.msra.mxu0 %v770
        %860 = vmatprep.subr.bf16.mxu0 %v768
        %861 = vmatpush1.bf16.msra.mxu0 %v767
        %862 = vmatprep.subr.bf16.mxu0 0
        %863 = vmatpush2.bf16.msra.mxu0 0
        %864 = vmatprep.subr.bf16.mxu0 0
        %865 = vmatpush2.bf16.msra.mxu0 0
        %866 = vmatprep.subr.bf16.mxu0 0
        %867 = vmatpush2.bf16.msra.mxu0 0
        %868 = vmatprep.subr.bf16.mxu0 0
        %869 = vmatpush2.bf16.msra.mxu0 0
        %870 = vmatprep.subr.bf16.mxu0 0
        %871 = vmatpush2.bf16.msra.mxu0 0
        %872 = vmatprep.subr.bf16.mxu0 0
        %873 = vmatpush2.bf16.msra.mxu0 0
        %874 = vmatprep.subr.bf16.mxu0 0
        %875 = vmatpush2.bf16.msra.mxu0 0
        %876 = vmatprep.subr.bf16.mxu0 %v792
        %877 = vmatpush2.bf16.msra.mxu0 %v791
        %878 = vmatprep.mubr.bf16.mxu0 %v823
        %879 = vmatmul.mubr.bf16.gmra.mxu0 %v653
        %v880 = vpop.f32.mrf.mxu0
        %v881 = vadd.f32 %v543, %v880
        %v882 = vpop.f32.mrf.mxu0
        %v883 = vadd.f32 %v543, %v882
        %v884 = vpop.f32.mrf.mxu0
        %v885 = vpop.f32.mrf.mxu0
        %886 = vmatprep.mubr.bf16.mxu0 %v826
        %887 = vmatmul.mubr.bf16.gmra.mxu0 %v655
        %v888 = vpop.f32.mrf.mxu0
        %v889 = vpop.f32.mrf.mxu0
        %v890 = vpop.f32.mrf.mxu0
        %v891 = vpop.f32.mrf.mxu0
        %892 = vmatprep.mubr.bf16.mxu0 %v829
        %893 = vmatmul.mubr.bf16.gmra.mxu0 %v657
        %v894 = vpop.f32.mrf.mxu0
        %v895 = vpop.f32.mrf.mxu0
        %v896 = vpop.f32.mrf.mxu0
        %v897 = vpop.f32.mrf.mxu0
        %898 = vmatprep.mubr.bf16.mxu0 %v832
        %899 = vmatmul.mubr.bf16.gmra.mxu0 %v659
        %v900 = vpop.f32.mrf.mxu0
        %v901 = vpop.f32.mrf.mxu0
        %v902 = vpop.f32.mrf.mxu0
        %v903 = vpop.f32.mrf.mxu0
        %904 = vmatprep.mubr.bf16.mxu0 %v835
        %905 = vmatmul.mubr.bf16.gmra.mxu0 %v661
        %v906 = vpop.f32.mrf.mxu0
        %v907 = vpop.f32.mrf.mxu0
        %v908 = vpop.f32.mrf.mxu0
        %v909 = vpop.f32.mrf.mxu0
        %910 = vmatprep.mubr.bf16.mxu0 %v838
        %911 = vmatmul.mubr.bf16.gmra.mxu0 %v663
        %v912 = vpop.f32.mrf.mxu0
        %v913 = vpop.f32.mrf.mxu0
        %v914 = vpop.f32.mrf.mxu0
        %v915 = vpop.f32.mrf.mxu0
        %916 = vmatprep.mubr.bf16.mxu0 %v841
        %917 = vmatmul.mubr.bf16.gmra.mxu0 %v665
        %v918 = vpop.f32.mrf.mxu0
        %v919 = vpop.f32.mrf.mxu0
        %v920 = vpop.f32.mrf.mxu0
        %v921 = vpop.f32.mrf.mxu0
        %922 = vmatprep.mubr.bf16.mxu0 %v844
        %923 = vmatmul.mubr.bf16.gmra.mxu0 %v667
        %v924 = vpop.f32.mrf.mxu0
        %v925 = vpop.f32.mrf.mxu0
        %v926 = vpop.f32.mrf.mxu0
        %v927 = vpop.f32.mrf.mxu0
        %928 = vdwg.mxu0
        %929 = vmatprep.subr.bf16.mxu0 0
        %930 = vmatpush1.bf16.msra.mxu0 %v790
        %931 = vmatprep.subr.bf16.mxu0 0
        %932 = vmatpush1.bf16.msra.mxu0 %v787
        %933 = vmatprep.subr.bf16.mxu0 0
        %934 = vmatpush1.bf16.msra.mxu0 %v784
        %935 = vmatprep.subr.bf16.mxu0 0
        %936 = vmatpush1.bf16.msra.mxu0 %v781
        %937 = vmatprep.subr.bf16.mxu0 0
        %938 = vmatpush1.bf16.msra.mxu0 %v778
        %939 = vmatprep.subr.bf16.mxu0 0
        %940 = vmatpush1.bf16.msra.mxu0 %v775
        %941 = vmatprep.subr.bf16.mxu0 0
        %942 = vmatpush1.bf16.msra.mxu0 %v772
        %943 = vmatprep.subr.bf16.mxu0 0
        %944 = vmatpush1.bf16.msra.mxu0 %v769
        %945 = vmatprep.subr.bf16.mxu0 0
        %946 = vmatpush2.bf16.msra.mxu0 0
        %947 = vmatprep.subr.bf16.mxu0 0
        %948 = vmatpush2.bf16.msra.mxu0 0
        %949 = vmatprep.subr.bf16.mxu0 0
        %950 = vmatpush2.bf16.msra.mxu0 0
        %951 = vmatprep.subr.bf16.mxu0 0
        %952 = vmatpush2.bf16.msra.mxu0 0
        %953 = vmatprep.subr.bf16.mxu0 0
        %954 = vmatpush2.bf16.msra.mxu0 0
        %955 = vmatprep.subr.bf16.mxu0 0
        %956 = vmatpush2.bf16.msra.mxu0 0
        %957 = vmatprep.subr.bf16.mxu0 0
        %958 = vmatpush2.bf16.msra.mxu0 0
        %959 = vmatprep.subr.bf16.mxu0 0
        %960 = vmatpush2.bf16.msra.mxu0 %v793
        %961 = vmatprep.mubr.bf16.mxu0 %v823
        %962 = vmatmul.mubr.bf16.gmra.mxu0 %v653
        %v963 = vpop.f32.mrf.mxu0
        %v964 = vadd.f32 %v543, %v963
        %v965 = vpop.f32.mrf.mxu0
        %v966 = vpop.f32.mrf.mxu0
        %v967 = vpop.f32.mrf.mxu0
        %968 = vmatprep.mubr.bf16.mxu0 %v826
        %969 = vmatmul.mubr.bf16.gmra.mxu0 %v655
        %v970 = vpop.f32.mrf.mxu0
        %v971 = vpop.f32.mrf.mxu0
        %v972 = vpop.f32.mrf.mxu0
        %v973 = vpop.f32.mrf.mxu0
        %974 = vmatprep.mubr.bf16.mxu0 %v829
        %975 = vmatmul.mubr.bf16.gmra.mxu0 %v657
        %v976 = vpop.f32.mrf.mxu0
        %v977 = vpop.f32.mrf.mxu0
        %v978 = vpop.f32.mrf.mxu0
        %v979 = vpop.f32.mrf.mxu0
        %980 = vmatprep.mubr.bf16.mxu0 %v832
        %981 = vmatmul.mubr.bf16.gmra.mxu0 %v659
        %v982 = vpop.f32.mrf.mxu0
        %v983 = vpop.f32.mrf.mxu0
        %v984 = vpop.f32.mrf.mxu0
        %v985 = vpop.f32.mrf.mxu0
        %986 = vmatprep.mubr.bf16.mxu0 %v835
        %987 = vmatmul.mubr.bf16.gmra.mxu0 %v661
        %v988 = vpop.f32.mrf.mxu0
        %v989 = vpop.f32.mrf.mxu0
        %v990 = vpop.f32.mrf.mxu0
        %v991 = vpop.f32.mrf.mxu0
        %992 = vmatprep.mubr.bf16.mxu0 %v838
        %993 = vmatmul.mubr.bf16.gmra.mxu0 %v663
        %v994 = vpop.f32.mrf.mxu0
        %v995 = vpop.f32.mrf.mxu0
        %v996 = vpop.f32.mrf.mxu0
        %v997 = vpop.f32.mrf.mxu0
        %998 = vmatprep.mubr.bf16.mxu0 %v841
        %999 = vmatmul.mubr.bf16.gmra.mxu0 %v665
        %v1000 = vpop.f32.mrf.mxu0
        %v1001 = vpop.f32.mrf.mxu0
        %v1002 = vpop.f32.mrf.mxu0
        %v1003 = vpop.f32.mrf.mxu0
        %1004 = vmatprep.mubr.bf16.mxu0 %v844
        %1005 = vmatmul.mubr.bf16.gmra.mxu0 %v667
        %v1006 = vpop.f32.mrf.mxu0
        %v1007 = vpop.f32.mrf.mxu0
        %v1008 = vpop.f32.mrf.mxu0
        %v1009 = vpop.f32.mrf.mxu0
        %1010 = vdwg.mxu0
        %v1011 = vmax.f32 %v881, 0.0
        %v1012 = vmax.f32 %v883, 0.0
        %v1013 = vmax.f32 %v964, 0.0
        %1014 = vst [vmem:[%s187] sm:$0xff] %v1011
        %1015 = vst [vmem:[%s187 + $0x8] sm:$0xff] %v1012
        %vm1016 = vcmask 261120
        %1017 = vst.msk [vmem:[%s187 + $0x10] sm:$0xff] %vm1016, %v1013
        %s1018 = sand.u32 %s109, 1
        %s1019 = scalar_lea.sflag [#allocation4], %s1018
        %s1020 = sand.u32 %s109, 1
        %s1021 = smul.addr %s1020, 24
        %s1022 = scalar_lea.vmem [#allocation3], %s1021
        // Predicated region
        $region33: #{tpu_custom_call.1} parent=31 // pred_check
          %p1023 = pneg %p119
        $region34: #{tpu_custom_call.1} parent=31 // pred_check_branch
          %1025 = sbr.rel (%p1023) target = $region36
        $region35: #{tpu_custom_call.1} parent=31 // pred_region
          %s1027 = ssub.s32 384, 384
          %1028 = vsyncadd %s1019, %s1027
          %s1029 = smul.addr %s22, 3
          %s1030 = smul.addr %s21, 3
          %s1031 = sadd.s32 %s1029, %s1030
          %s1032 = smul.addr %s1031, 128
          %s1033 = scalar_lea.hbm %s3, %s1032
          %s1035 = sshll.u32 %s1022, 4
          %s1036 = int_to_ptr.vmem [resolvable:$true] %s1035
          %1038 = dma.vmem_to_hbm [thread:$0]  %s1036, 384, %s1033, %s1019
        $region36: #{tpu_custom_call.1} parent=31 // pred_fallthru
          _
      $region32: #{tpu_custom_call.1} parent=5 // pred_fallthru
        _
      %p1039 = scmp.le.s32.totalorder 2, %s12
      // Predicated region
      $region37: #{tpu_custom_call.1} parent=5 // pred_check
        %p1040 = pneg %p1039
      $region38: #{tpu_custom_call.1} parent=5 // pred_check_branch
        %1042 = sbr.rel (%p1040) target = $region40
      $region39: #{tpu_custom_call.1} parent=5 // pred_region
        %s1043 = ssub.s32 %s12, 2
        // Predicated region
        $region41: #{tpu_custom_call.1} parent=39 // pred_check
          %p1044 = pneg %p125
        $region42: #{tpu_custom_call.1} parent=39 // pred_check_branch
          %1046 = sbr.rel (%p1044) target = $region44
        $region43: #{tpu_custom_call.1} parent=39 // pred_region
          %s1047 = sand.u32 %s110, 1
          %s1048 = scalar_lea.sflag [#allocation4], %s1047
          %s1049 = sand.u32 %s110, 1
          %s1050 = smul.addr %s1049, 24
          %s1051 = scalar_lea.vmem [#allocation3], %s1050
          %1052 = dma.done %s1048, 384
        $region44: #{tpu_custom_call.1} parent=39 // pred_fallthru
          _
      $region40: #{tpu_custom_call.1} parent=5 // pred_fallthru
        _
    $region6: #{tpu_custom_call.1} parent=1 // loop_footer
      %s16 = sadd.s32 1, %s12
    $region7: #{tpu_custom_call.1} parent=1 // loop_footer_branch
      %11 = sbr.rel target = $region3
    $region8: #{tpu_custom_call.1} parent=1 // loop_exit
      _
    %1053 = vsyncpa [#allocation4], 1
    %s1054 = scalar_lea.sflag [#allocation4], 1
    %1055 = vsyncpa %s1054, 1

</llo_original>
